<compile_context>
chip_gen: v7x
topology: tpu7x:2x2x1
jax: 0.10.0
libtpu: 0.0.40
codegen_flags: <defaults>
</compile_context>

<pallas_src>
import functools

import jax
import jax.numpy as jnp
from jax import lax
from jax.experimental import pallas as pl
from jax.experimental.pallas import tpu as pltpu


def _round_up(n, m):
    return (n + m - 1) // m * m


def _choose_tile_v(V, t_pad, itemsize, target_block_bytes=2 * 1024 * 1024):
    """Pick a variate tile (multiple of 8) so one (1, TV, T_pad) block ~2 MiB."""
    tv = max(8, (target_block_bytes // (t_pad * itemsize)) // 8 * 8)
    return int(min(tv, _round_up(V, 8)))


# --------------------------------------------------------------------------
# Forward kernel: per-(batch, variate-tile) instance norm over time + affine.
# --------------------------------------------------------------------------
def _revin_fwd_kernel(x_ref, gamma_ref, beta_ref,
                      out_ref, mean_ref, var_ref, *, eps, t_true):
    x = x_ref[...].astype(jnp.float32)                 # (1, TV, T_pad)
    t_pad = x.shape[-1]
    inv_t = jnp.float32(1.0 / t_true)

    # Padded columns are zero (wrapper pads), so the sum needs no mask; divide
    # by the true T.
    mean = jnp.sum(x, axis=-1, keepdims=True) * inv_t  # (1, TV, 1)
    centered = x - mean

    if t_true != t_pad:
        lane = lax.broadcasted_iota(jnp.int32, (1, 1, t_pad), 2)
        centered_m = jnp.where(lane < t_true, centered, 0.0)
    else:
        centered_m = centered
    var = jnp.sum(centered_m * centered_m, axis=-1, keepdims=True) * inv_t

    var_rsqrt = lax.rsqrt(jnp.maximum(var, eps))       # (1, TV, 1)
    gamma = gamma_ref[...].astype(jnp.float32)         # (TV, 1) -> broadcasts
    beta = beta_ref[...].astype(jnp.float32)           # (TV, 1) -> broadcasts

    # Fold gamma into the per-variate scale: only 3 full-tile VPU ops remain.
    scale = var_rsqrt * gamma                          # (1, TV, 1)
    out_ref[...] = (centered * scale + beta).astype(out_ref.dtype)
    mean_ref[...] = mean
    var_ref[...] = var


# --------------------------------------------------------------------------
# Reverse kernel: undo the affine + normalization given stored statistics.
# --------------------------------------------------------------------------
def _revin_rev_kernel(y_ref, gamma_ref, beta_ref, mean_ref, var_ref,
                      out_ref, *, eps):
    gamma = gamma_ref[...].astype(jnp.float32)         # (TV, 1)
    beta = beta_ref[...].astype(jnp.float32)           # (TV, 1)
    mean = mean_ref[...]                               # (1, TV, 1) f32
    var = var_ref[...]                                 # (1, TV, 1) f32

    # Matches torch: sign(gamma) * clamp(|gamma|, min=eps).  The divide and
    # sqrt happen on the tiny per-variate tile, not the (TV, T_pad) slab.
    clamped_gamma = jnp.sign(gamma) * jnp.maximum(jnp.abs(gamma), eps)
    scale = jnp.sqrt(var) / clamped_gamma              # (1, TV, 1)

    y = y_ref[...].astype(jnp.float32)                 # (1, TV, T_pad)
    out_ref[...] = ((y - beta) * scale + mean).astype(out_ref.dtype)


# --------------------------------------------------------------------------
# Wrapper
# --------------------------------------------------------------------------
def revin_forward(x, gamma, beta, *, eps=1e-5, return_statistics=False):
    """RevIN forward.  x: (B, V, T); gamma/beta: (V, 1)."""
    B, V, T = x.shape
    assert gamma.shape == (V, 1) and beta.shape == (V, 1)

    itemsize = jnp.dtype(x.dtype).itemsize
    t_pad = _round_up(T, 128)                          # lane-dense main streams
    tile_v = _choose_tile_v(V, t_pad, itemsize)
    v_pad = _round_up(V, tile_v)
    grid = (B, v_pad // tile_v)

    # Zero-pad inputs (padded gamma rows = 1 so padded lanes never divide by 0).
    x_p = x
    if (v_pad, t_pad) != (V, T):
        x_p = jnp.pad(x, ((0, 0), (0, v_pad - V), (0, t_pad - T)))
    gamma_p = gamma.astype(jnp.float32)
    beta_p = beta.astype(jnp.float32)
    if v_pad != V:
        gamma_p = jnp.pad(gamma_p, ((0, v_pad - V), (0, 0)), constant_values=1.0)
        beta_p = jnp.pad(beta_p, ((0, v_pad - V), (0, 0)))

    compiler_params = pltpu.CompilerParams(
        dimension_semantics=("parallel", "parallel"),
        vmem_limit_bytes=32 * 1024 * 1024,
    )

    big_in_spec = pl.BlockSpec((1, tile_v, t_pad), lambda b, v: (b, v, 0))
    param_spec = pl.BlockSpec((tile_v, 1), lambda b, v: (v, 0))
    stat_spec = pl.BlockSpec((1, tile_v, 1), lambda b, v: (b, v, 0))

    fwd = pl.pallas_call(
        functools.partial(_revin_fwd_kernel, eps=eps, t_true=T),
        out_shape=(
            jax.ShapeDtypeStruct((B, v_pad, t_pad), x.dtype),    # rescaled
            jax.ShapeDtypeStruct((B, v_pad, 1), jnp.float32),    # mean
            jax.ShapeDtypeStruct((B, v_pad, 1), jnp.float32),    # var
        ),
        grid_spec=pltpu.PrefetchScalarGridSpec(
            num_scalar_prefetch=0,
            grid=grid,
            in_specs=[big_in_spec, param_spec, param_spec],
            out_specs=(big_in_spec, stat_spec, stat_spec),
        ),
        compiler_params=compiler_params,
    )
    rescaled_p, mean_p, var_p = fwd(x_p, gamma_p, beta_p)
    rescaled = rescaled_p[:, :V, :T]

    rev_call = pl.pallas_call(
        functools.partial(_revin_rev_kernel, eps=eps),
        out_shape=jax.ShapeDtypeStruct((B, v_pad, t_pad), x.dtype),
        grid_spec=pltpu.PrefetchScalarGridSpec(
            num_scalar_prefetch=0,
            grid=grid,
            in_specs=[big_in_spec, param_spec, param_spec, stat_spec, stat_spec],
            out_specs=big_in_spec,
        ),
        compiler_params=compiler_params,
    )

    def reverse_fn(scaled_output):
        y = scaled_output
        if (v_pad, t_pad) != (V, T):
            y = jnp.pad(y, ((0, 0), (0, v_pad - V), (0, t_pad - T)))
        out_p = rev_call(y, gamma_p, beta_p, mean_p, var_p)
        return out_p[:, :V, :T]

    if not return_statistics:
        return rescaled, reverse_fn

    statistics = {
        "mean": mean_p[:, :V, :],        # float32, shape (B, V, 1)
        "variance": var_p[:, :V, :],     # float32, shape (B, V, 1)
        "gamma": gamma,
        "beta": beta,
    }
    return rescaled, reverse_fn, statistics


# --------------------------------------------------------------------------
# Pure-JAX reference (mirrors the PyTorch forward) for a sanity check.
# --------------------------------------------------------------------------
def _revin_ref(x, gamma, beta, eps=1e-5):
    xf = x.astype(jnp.float32)
    mean = jnp.mean(xf, axis=-1, keepdims=True)
    var = jnp.mean((xf - mean) ** 2, axis=-1, keepdims=True)
    var_rsqrt = jax.lax.rsqrt(jnp.maximum(var, eps))
    normed = (xf - mean) * var_rsqrt
    return (normed * gamma + beta).astype(x.dtype), mean, var


if __name__ == "__main__":
    key = jax.random.PRNGKey(0)
    B, V, T = 2, 4, 16                      # batch, num_variates, seq
    x = jax.random.normal(key, (B, V, T), dtype=jnp.float32) * 3.0 + 1.5

    # Deterministic parameter init, matching nn.Parameter shapes (V, 1).
    gamma = jnp.ones((V, 1), dtype=jnp.float32)
    beta = jnp.zeros((V, 1), dtype=jnp.float32)

    rescaled, reverse_fn, stats = revin_forward(
        x, gamma, beta, eps=1e-5, return_statistics=True)
    reconstructed = reverse_fn(rescaled)

    jax.block_until_ready(rescaled)
    jax.block_until_ready(reconstructed)

    # sanity checks against the pure-JAX reference
    ref_out, ref_mean, ref_var = _revin_ref(x, gamma, beta)
    assert jnp.allclose(rescaled, ref_out, atol=1e-5, rtol=1e-5)
    assert jnp.allclose(stats["mean"], ref_mean, atol=1e-5, rtol=1e-5)
    assert jnp.allclose(stats["variance"], ref_var, atol=1e-5, rtol=1e-5)
    assert jnp.allclose(reconstructed, x, atol=1e-4, rtol=1e-4)

    print("KERNEL_OK")
</pallas_src>

<mosaic_0001>
module attributes {stable_mosaic.version = 11 : i64} {
  func.func @_revin_fwd_kernel(%arg0: i32, %arg1: i32, %arg2: memref<1x8x128xf32, #tpu.memory_space<vmem>>, %arg3: memref<8x1xf32, #tpu.memory_space<vmem>>, %arg4: memref<8x1xf32, #tpu.memory_space<vmem>>, %arg5: memref<1x8x128xf32, #tpu.memory_space<vmem>>, %arg6: memref<1x8x1xf32, #tpu.memory_space<vmem>>, %arg7: memref<1x8x1xf32, #tpu.memory_space<vmem>>) attributes {dimension_semantics = [#tpu.dimension_semantics<parallel>, #tpu.dimension_semantics<parallel>], iteration_bounds = array<i64: 2, 1>, scalar_prefetch = 0 : i64, scratch_operands = 0 : i64, tpu.core_type = #tpu.core_type<tc>, window_params = [{transform_indices = @transform_0, window_bounds = array<i64: 1, 8, 128>}, {transform_indices = @transform_1, window_bounds = array<i64: 8, 1>}, {transform_indices = @transform_2, window_bounds = array<i64: 8, 1>}, {transform_indices = @transform_3, window_bounds = array<i64: 1, 8, 128>}, {transform_indices = @transform_4, window_bounds = array<i64: 1, 8, 1>}, {transform_indices = @transform_5, window_bounds = array<i64: 1, 8, 1>}]} {
    %c0 = arith.constant 0 : index
    %c0_0 = arith.constant 0 : index
    %c0_1 = arith.constant 0 : index
    %0 = vector.load %arg2[%c0, %c0_0, %c0_1] : memref<1x8x128xf32, #tpu.memory_space<vmem>>, vector<1x8x128xf32>
    %cst = arith.constant dense<0.000000e+00> : vector<1x8xf32>
    %1 = vector.multi_reduction <add>, %0, %cst [2] : vector<1x8x128xf32> to vector<1x8xf32>
    %2 = vector.shape_cast %1 : vector<1x8xf32> to vector<1x8x1xf32>
    %cst_2 = arith.constant 6.250000e-02 : f32
    %3 = vector.broadcast %cst_2 : f32 to vector<1x8x1xf32>
    %4 = arith.mulf %2, %3 : vector<1x8x1xf32>
    %5 = vector.broadcast %4 : vector<1x8x1xf32> to vector<1x8x128xf32>
    %6 = arith.subf %0, %5 : vector<1x8x128xf32>
    %7 = tpu.iota {dimensions = array<i32: 2>} : vector<1x1x128xi32>
    %c16_i32 = arith.constant 16 : i32
    %8 = vector.broadcast %c16_i32 : i32 to vector<1x1x128xi32>
    %9 = arith.cmpi slt, %7, %8 : vector<1x1x128xi32>
    %cst_3 = arith.constant 0.000000e+00 : f32
    %10 = vector.shape_cast %9 : vector<1x1x128xi1> to vector<1x1x128xi1>
    %11 = vector.broadcast %10 : vector<1x1x128xi1> to vector<1x8x128xi1>
    %12 = vector.broadcast %cst_3 : f32 to vector<1x8x128xf32>
    %13 = arith.select %11, %6, %12 : vector<1x8x128xi1>, vector<1x8x128xf32>
    %14 = arith.mulf %13, %13 : vector<1x8x128xf32>
    %cst_4 = arith.constant dense<0.000000e+00> : vector<1x8xf32>
    %15 = vector.multi_reduction <add>, %14, %cst_4 [2] : vector<1x8x128xf32> to vector<1x8xf32>
    %16 = vector.shape_cast %15 : vector<1x8xf32> to vector<1x8x1xf32>
    %cst_5 = arith.constant 6.250000e-02 : f32
    %17 = vector.broadcast %cst_5 : f32 to vector<1x8x1xf32>
    %18 = arith.mulf %16, %17 : vector<1x8x1xf32>
    %cst_6 = arith.constant 9.99999974E-6 : f32
    %19 = vector.broadcast %cst_6 : f32 to vector<1x8x1xf32>
    %20 = arith.maximumf %18, %19 : vector<1x8x1xf32>
    %21 = math.rsqrt %20 : vector<1x8x1xf32>
    %c0_7 = arith.constant 0 : index
    %c0_8 = arith.constant 0 : index
    %22 = vector.load %arg3[%c0_7, %c0_8] : memref<8x1xf32, #tpu.memory_space<vmem>>, vector<8x1xf32>
    %c0_9 = arith.constant 0 : index
    %c0_10 = arith.constant 0 : index
    %23 = vector.load %arg4[%c0_9, %c0_10] : memref<8x1xf32, #tpu.memory_space<vmem>>, vector<8x1xf32>
    %24 = vector.shape_cast %22 : vector<8x1xf32> to vector<1x8x1xf32>
    %25 = arith.mulf %21, %24 : vector<1x8x1xf32>
    %26 = vector.broadcast %25 : vector<1x8x1xf32> to vector<1x8x128xf32>
    %27 = arith.mulf %6, %26 : vector<1x8x128xf32>
    %28 = vector.shape_cast %23 : vector<8x1xf32> to vector<1x8x1xf32>
    %29 = vector.broadcast %28 : vector<1x8x1xf32> to vector<1x8x128xf32>
    %30 = arith.addf %27, %29 : vector<1x8x128xf32>
    %c0_11 = arith.constant 0 : index
    %c0_12 = arith.constant 0 : index
    %c0_13 = arith.constant 0 : index
    %31 = vector.load %arg5[%c0_11, %c0_12, %c0_13] : memref<1x8x128xf32, #tpu.memory_space<vmem>>, vector<1x8x128xf32>
    tpu.vector_store %arg5[%c0_11, %c0_12, %c0_13], %30 {strides = array<i32>} : memref<1x8x128xf32, #tpu.memory_space<vmem>>, vector<1x8x128xf32>,
    %c0_14 = arith.constant 0 : index
    %c0_15 = arith.constant 0 : index
    %c0_16 = arith.constant 0 : index
    %32 = vector.load %arg6[%c0_14, %c0_15, %c0_16] : memref<1x8x1xf32, #tpu.memory_space<vmem>>, vector<1x8x1xf32>
    tpu.vector_store %arg6[%c0_14, %c0_15, %c0_16], %4 {strides = array<i32>} : memref<1x8x1xf32, #tpu.memory_space<vmem>>, vector<1x8x1xf32>,
    %c0_17 = arith.constant 0 : index
    %c0_18 = arith.constant 0 : index
    %c0_19 = arith.constant 0 : index
    %33 = vector.load %arg7[%c0_17, %c0_18, %c0_19] : memref<1x8x1xf32, #tpu.memory_space<vmem>>, vector<1x8x1xf32>
    tpu.vector_store %arg7[%c0_17, %c0_18, %c0_19], %18 {strides = array<i32>} : memref<1x8x1xf32, #tpu.memory_space<vmem>>, vector<1x8x1xf32>,
    return
  }
  func.func @transform_0(%arg0: i32, %arg1: i32) -> (i32, i32, i32) {
    %c0_i32 = arith.constant 0 : i32
    %c0_i32_0 = arith.constant 0 : i32
    return %arg0, %arg1, %c0_i32 : i32, i32, i32
  }
  func.func @transform_1(%arg0: i32, %arg1: i32) -> (i32, i32) {
    %c0_i32 = arith.constant 0 : i32
    %c0_i32_0 = arith.constant 0 : i32
    return %arg1, %c0_i32 : i32, i32
  }
  func.func @transform_2(%arg0: i32, %arg1: i32) -> (i32, i32) {
    %c0_i32 = arith.constant 0 : i32
    %c0_i32_0 = arith.constant 0 : i32
    return %arg1, %c0_i32 : i32, i32
  }
  func.func @transform_3(%arg0: i32, %arg1: i32) -> (i32, i32, i32) {
    %c0_i32 = arith.constant 0 : i32
    %c0_i32_0 = arith.constant 0 : i32
    return %arg0, %arg1, %c0_i32 : i32, i32, i32
  }
  func.func @transform_4(%arg0: i32, %arg1: i32) -> (i32, i32, i32) {
    %c0_i32 = arith.constant 0 : i32
    %c0_i32_0 = arith.constant 0 : i32
    return %arg0, %arg1, %c0_i32 : i32, i32, i32
  }
  func.func @transform_5(%arg0: i32, %arg1: i32) -> (i32, i32, i32) {
    %c0_i32 = arith.constant 0 : i32
    %c0_i32_0 = arith.constant 0 : i32
    return %arg0, %arg1, %c0_i32 : i32, i32, i32
  }
}

</mosaic_0001>

<llo_original>
// kernel: tpu_custom_call.1
$region0: #{tpu_custom_call.1}
  #allocation0 [shape = 'u32[]', space=smem, size = 0x4, offset = 0x4, fixed_abs, tag = 'smem constant byte address 0x4 - core index']
  #allocation1 [shape = 'u32[144,128]{1,0:T(1,128)}', space=vmem, size = 0x12000, scoped, tag = 'internal scratch']
  %s0 = inlined_call_operand.vmem [shape: f32[2,8,128], index: 0, kind: input, shape index: {}]
  %s1 = inlined_call_operand.vmem [shape: f32[8,1], index: 1, kind: input, shape index: {}]
  %s2 = inlined_call_operand.vmem [shape: f32[8,1], index: 2, kind: input, shape index: {}]
  %s3 = inlined_call_operand.hbm [shape: f32[2,8,128], index: 3, kind: output, shape index: {0}]
  %s4 = inlined_call_operand.vmem [shape: f32[2,8,1], index: 4, kind: output, shape index: {1}]
  %s5 = inlined_call_operand.vmem [shape: f32[2,8,1], index: 5, kind: output, shape index: {2}]
  %6 = xla_tuple %s3, %s4, %s5
  %s7 = sld [smem:[#allocation0]]
  $region61: #{tpu_custom_call.1} parent=0
    _
  %s9 = ssub.s32 1, %s7
  %s10 = scalar_select 0, %s9, %s7
  $region1: #{tpu_custom_call.1} parent=0
    #allocation2 [shape = 'u8[8192]{0}', space=vmem, size = 0x2000, scoped, tag = 'output window, operand 0']
    #allocation3 [shape = 's32[2]{0}', space=sflag, size = 0x8, scoped, tag = 'scoped memory for tpu_custom_call.1']
    %11 = vsyncpa [#allocation3], 0
    %s12 = scalar_lea.sflag [#allocation3], 1
    %13 = vsyncpa %s12, 0
    loop: start=0, step=1, limit=4
    $region2: #{tpu_custom_call.1} parent=1 // loop_pre_header
      _
    $region3: #{tpu_custom_call.1} parent=1 // loop_header
      %s15 = sphi 0, %s19
      %p16 = scmp.ge.s32.totalorder %s15, 4
      %s22 = sphi 0, %s34
      %s23 = sphi 0, %s30
      %s24 = sphi 0, %s22
      %s25 = sphi 0, %s23
      %s26 = sphi 0, %s24
      %s27 = sphi 0, %s25
      %s39 = sphi 0, %s41
      %s42 = sphi 0, %s39
      %s43 = sphi 0, %s42
      %s59 = sphi 0, %s43
      %s65 = sphi 0, %s67
      %s68 = sphi 0, %s65
      %s69 = sphi 0, %s68
      %s85 = sphi 0, %s69
      %s91 = sphi 0, %s93
      %s94 = sphi 0, %s91
      %s95 = sphi 0, %s94
      %s111 = sphi 0, %s95
      %s119 = sphi 0, %s121
      %s122 = sphi 0, %s119
      %s123 = sphi 0, %s122
      %s139 = sphi 0, %s123
      %s147 = sphi 0, %s149
      %s150 = sphi 0, %s147
      %s151 = sphi 0, %s150
      %s167 = sphi 0, %s151
      %s175 = sphi 0, %s177
      %s178 = sphi 0, %s175
      %s179 = sphi 0, %s178
      %s195 = sphi 0, %s179
    $region4: #{tpu_custom_call.1} parent=1 // loop_header_branch
      %18 = sbr.rel (%p16) target = $region8
    $region5: #{tpu_custom_call.1} parent=1 // loop_body
      %s20 = ssub.s32 %s15, 1
      %s21 = ssub.s32 %s15, 2
      %s28 = sadd.s32 1, %s23
      %p29 = scmp.ge.s32.totalorder %s28, 1
      %s30 = scalar_select %p29, 0, %s28
      %s31 = sadd.s32 1, %s22
      %s32 = scalar_select %p29, %s31, %s22
      %p33 = scmp.ge.s32.totalorder %s32, 2
      %s34 = scalar_select %p33, 0, %s32
      %s35 = ssub.s32 %s22, %s34
      %s36 = ssub.s32 %s23, %s30
      %s37 = sor.u32 %s35, %s36
      %p38 = scmp.eq.s32.totalorder %s37, 0
      %s40 = sadd.s32 %s39, 1
      %s41 = scalar_select %p38, %s39, %s40
      %p44 = pneg %p38
      %p45 = scmp.eq.s32.totalorder %s15, 1
      %p46 = por %p44, %p45
      %p47 = scmp.ne.s32.totalorder %s39, %s42
      %p48 = scmp.eq.s32.totalorder %s15, 0
      %p49 = por %p47, %p48
      %p50 = scmp.ne.s32.totalorder %s39, %s42
      %p51 = scmp.eq.s32.totalorder %s20, 1
      %p52 = por %p50, %p51
      %p53 = scmp.ne.s32.totalorder %s42, %s43
      %p54 = scmp.eq.s32.totalorder %s20, 0
      %p55 = por %p53, %p54
      %p56 = scmp.ne.s32.totalorder %s42, %s43
      %p57 = scmp.eq.s32.totalorder %s21, 1
      %p58 = por %p56, %p57
      %p60 = scmp.ne.s32.totalorder %s43, %s59
      %p61 = scmp.eq.s32.totalorder %s21, 0
      %p62 = por %p60, %p61
      %s63 = ssub.s32 %s23, %s30
      %p64 = scmp.eq.s32.totalorder %s63, 0
      %s66 = sadd.s32 %s65, 1
      %s67 = scalar_select %p64, %s65, %s66
      %p70 = pneg %p64
      %p71 = scmp.eq.s32.totalorder %s15, 1
      %p72 = por %p70, %p71
      %p73 = scmp.ne.s32.totalorder %s65, %s68
      %p74 = scmp.eq.s32.totalorder %s15, 0
      %p75 = por %p73, %p74
      %p76 = scmp.ne.s32.totalorder %s65, %s68
      %p77 = scmp.eq.s32.totalorder %s20, 1
      %p78 = por %p76, %p77
      %p79 = scmp.ne.s32.totalorder %s68, %s69
      %p80 = scmp.eq.s32.totalorder %s20, 0
      %p81 = por %p79, %p80
      %p82 = scmp.ne.s32.totalorder %s68, %s69
      %p83 = scmp.eq.s32.totalorder %s21, 1
      %p84 = por %p82, %p83
      %p86 = scmp.ne.s32.totalorder %s69, %s85
      %p87 = scmp.eq.s32.totalorder %s21, 0
      %p88 = por %p86, %p87
      %s89 = ssub.s32 %s23, %s30
      %p90 = scmp.eq.s32.totalorder %s89, 0
      %s92 = sadd.s32 %s91, 1
      %s93 = scalar_select %p90, %s91, %s92
      %p96 = pneg %p90
      %p97 = scmp.eq.s32.totalorder %s15, 1
      %p98 = por %p96, %p97
      %p99 = scmp.ne.s32.totalorder %s91, %s94
      %p100 = scmp.eq.s32.totalorder %s15, 0
      %p101 = por %p99, %p100
      %p102 = scmp.ne.s32.totalorder %s91, %s94
      %p103 = scmp.eq.s32.totalorder %s20, 1
      %p104 = por %p102, %p103
      %p105 = scmp.ne.s32.totalorder %s94, %s95
      %p106 = scmp.eq.s32.totalorder %s20, 0
      %p107 = por %p105, %p106
      %p108 = scmp.ne.s32.totalorder %s94, %s95
      %p109 = scmp.eq.s32.totalorder %s21, 1
      %p110 = por %p108, %p109
      %p112 = scmp.ne.s32.totalorder %s95, %s111
      %p113 = scmp.eq.s32.totalorder %s21, 0
      %p114 = por %p112, %p113
      %s115 = ssub.s32 %s22, %s34
      %s116 = ssub.s32 %s23, %s30
      %s117 = sor.u32 %s115, %s116
      %p118 = scmp.eq.s32.totalorder %s117, 0
      %s120 = sadd.s32 %s119, 1
      %s121 = scalar_select %p118, %s119, %s120
      %p124 = pneg %p118
      %p125 = scmp.eq.s32.totalorder %s15, 1
      %p126 = por %p124, %p125
      %p127 = scmp.ne.s32.totalorder %s119, %s122
      %p128 = scmp.eq.s32.totalorder %s15, 0
      %p129 = por %p127, %p128
      %p130 = scmp.ne.s32.totalorder %s119, %s122
      %p131 = scmp.eq.s32.totalorder %s20, 1
      %p132 = por %p130, %p131
      %p133 = scmp.ne.s32.totalorder %s122, %s123
      %p134 = scmp.eq.s32.totalorder %s20, 0
      %p135 = por %p133, %p134
      %p136 = scmp.ne.s32.totalorder %s122, %s123
      %p137 = scmp.eq.s32.totalorder %s21, 1
      %p138 = por %p136, %p137
      %p140 = scmp.ne.s32.totalorder %s123, %s139
      %p141 = scmp.eq.s32.totalorder %s21, 0
      %p142 = por %p140, %p141
      %s143 = ssub.s32 %s22, %s34
      %s144 = ssub.s32 %s23, %s30
      %s145 = sor.u32 %s143, %s144
      %p146 = scmp.eq.s32.totalorder %s145, 0
      %s148 = sadd.s32 %s147, 1
      %s149 = scalar_select %p146, %s147, %s148
      %p152 = pneg %p146
      %p153 = scmp.eq.s32.totalorder %s15, 1
      %p154 = por %p152, %p153
      %p155 = scmp.ne.s32.totalorder %s147, %s150
      %p156 = scmp.eq.s32.totalorder %s15, 0
      %p157 = por %p155, %p156
      %p158 = scmp.ne.s32.totalorder %s147, %s150
      %p159 = scmp.eq.s32.totalorder %s20, 1
      %p160 = por %p158, %p159
      %p161 = scmp.ne.s32.totalorder %s150, %s151
      %p162 = scmp.eq.s32.totalorder %s20, 0
      %p163 = por %p161, %p162
      %p164 = scmp.ne.s32.totalorder %s150, %s151
      %p165 = scmp.eq.s32.totalorder %s21, 1
      %p166 = por %p164, %p165
      %p168 = scmp.ne.s32.totalorder %s151, %s167
      %p169 = scmp.eq.s32.totalorder %s21, 0
      %p170 = por %p168, %p169
      %s171 = ssub.s32 %s22, %s34
      %s172 = ssub.s32 %s23, %s30
      %s173 = sor.u32 %s171, %s172
      %p174 = scmp.eq.s32.totalorder %s173, 0
      %s176 = sadd.s32 %s175, 1
      %s177 = scalar_select %p174, %s175, %s176
      %p180 = pneg %p174
      %p181 = scmp.eq.s32.totalorder %s15, 1
      %p182 = por %p180, %p181
      %p183 = scmp.ne.s32.totalorder %s175, %s178
      %p184 = scmp.eq.s32.totalorder %s15, 0
      %p185 = por %p183, %p184
      %p186 = scmp.ne.s32.totalorder %s175, %s178
      %p187 = scmp.eq.s32.totalorder %s20, 1
      %p188 = por %p186, %p187
      %p189 = scmp.ne.s32.totalorder %s178, %s179
      %p190 = scmp.eq.s32.totalorder %s20, 0
      %p191 = por %p189, %p190
      %p192 = scmp.ne.s32.totalorder %s178, %s179
      %p193 = scmp.eq.s32.totalorder %s21, 1
      %p194 = por %p192, %p193
      %p196 = scmp.ne.s32.totalorder %s179, %s195
      %p197 = scmp.eq.s32.totalorder %s21, 0
      %p198 = por %p196, %p197
      %p199 = scmp.le.s32.totalorder 1, %s15
      %p200 = scmp.lt.s32.totalorder %s15, 3
      %p201 = pnand %p199, %p200
      %p202 = pneg %p201
      // Predicated region
      $region9: #{tpu_custom_call.1} parent=5 // pred_check
        _
      $region10: #{tpu_custom_call.1} parent=5 // pred_check_branch
        %204 = sbr.rel (%p201) target = $region12
      $region11: #{tpu_custom_call.1} parent=5 // pred_region
        %s205 = ssub.s32 %s15, 1
        // Predicated region
        $region13: #{tpu_custom_call.1} parent=11 // pred_check
          %p206 = pneg %p81
        $region14: #{tpu_custom_call.1} parent=11 // pred_check_branch
          %208 = sbr.rel (%p206) target = $region16
        $region15: #{tpu_custom_call.1} parent=11 // pred_region
          %p209 = scmp.lt.s32.totalorder %s25, 0
          %s210 = scalar_select %p209, %s25, 0
          %s211 = smul.addr %s210, 8
          %s212 = scalar_lea.vmem %s1, %s211
        $region16: #{tpu_custom_call.1} parent=11 // pred_fallthru
          _
        // Predicated region
        $region17: #{tpu_custom_call.1} parent=11 // pred_check
          %p213 = pneg %p107
        $region18: #{tpu_custom_call.1} parent=11 // pred_check_branch
          %215 = sbr.rel (%p213) target = $region20
        $region19: #{tpu_custom_call.1} parent=11 // pred_region
          %p216 = scmp.lt.s32.totalorder %s25, 0
          %s217 = scalar_select %p216, %s25, 0
          %s218 = smul.addr %s217, 8
          %s219 = scalar_lea.vmem %s2, %s218
        $region20: #{tpu_custom_call.1} parent=11 // pred_fallthru
          _
      $region12: #{tpu_custom_call.1} parent=5 // pred_fallthru
        _
      %p220 = scmp.lt.s32.totalorder %s15, 2
      // Predicated region
      $region21: #{tpu_custom_call.1} parent=5 // pred_check
        %p221 = pneg %p220
      $region22: #{tpu_custom_call.1} parent=5 // pred_check_branch
        %223 = sbr.rel (%p221) target = $region24
      $region23: #{tpu_custom_call.1} parent=5 // pred_region
        // Predicated region
        $region25: #{tpu_custom_call.1} parent=23 // pred_check
          %p224 = pneg %p49
        $region26: #{tpu_custom_call.1} parent=23 // pred_check_branch
          %226 = sbr.rel (%p224) target = $region28
        $region27: #{tpu_custom_call.1} parent=23 // pred_region
          %p227 = scmp.lt.s32.totalorder %s22, 1
          %s228 = scalar_select %p227, %s22, 1
          %p229 = scmp.lt.s32.totalorder %s23, 0
          %s230 = scalar_select %p229, %s23, 0
          %s231 = sadd.s32 %s230, %s228
          %s232 = smul.addr %s231, 8
          %s233 = scalar_lea.vmem %s0, %s232
        $region28: #{tpu_custom_call.1} parent=23 // pred_fallthru
          _
      $region24: #{tpu_custom_call.1} parent=5 // pred_fallthru
        _
      %p234 = scmp.le.s32.totalorder 1, %s15
      %p235 = scmp.lt.s32.totalorder %s15, 3
      %p236 = pnand %p234, %p235
      %p237 = pneg %p236
      // Predicated region
      $region29: #{tpu_custom_call.1} parent=5 // pred_check
        _
      $region30: #{tpu_custom_call.1} parent=5 // pred_check_branch
        %239 = sbr.rel (%p236) target = $region32
      $region31: #{tpu_custom_call.1} parent=5 // pred_region
        %s240 = ssub.s32 %s15, 1
        %p241 = scmp.lt.s32.totalorder %s24, 1
        %s242 = scalar_select %p241, %s24, 1
        %p243 = scmp.lt.s32.totalorder %s25, 0
        %s244 = scalar_select %p243, %s25, 0
        %s245 = sadd.s32 %s244, %s242
        %s246 = smul.addr %s245, 8
        %s247 = scalar_lea.vmem %s0, %s246
        %p248 = pneg %p55
        %p249 = pneg %p52
        %p250 = scmp.lt.s32.totalorder %s25, 0
        %s251 = scalar_select %p250, %s25, 0
        %s252 = smul.addr %s251, 8
        %s253 = scalar_lea.vmem %s1, %s252
        %p254 = pneg %p81
        %p255 = pneg %p78
        %p256 = scmp.lt.s32.totalorder %s25, 0
        %s257 = scalar_select %p256, %s25, 0
        %s258 = smul.addr %s257, 8
        %s259 = scalar_lea.vmem %s2, %s258
        %p260 = pneg %p107
        %p261 = pneg %p104
        %p262 = pneg %p135
        %p263 = pneg %p132
        %s264 = sand.u32 %s122, 1
        %s265 = scalar_lea.sflag [#allocation3], %s264
        %s266 = sand.u32 %s122, 1
        %s267 = smul.addr %s266, 8
        %s268 = scalar_lea.vmem [#allocation2], %s267
        %p269 = pneg %p163
        %p270 = pneg %p160
        %p271 = scmp.lt.s32.totalorder %s24, 1
        %s272 = scalar_select %p271, %s24, 1
        %p273 = scmp.lt.s32.totalorder %s25, 0
        %s274 = scalar_select %p273, %s25, 0
        %s275 = sadd.s32 %s274, %s272
        %s276 = smul.addr %s275, 8
        %s277 = scalar_lea.vmem %s4, %s276
        %p278 = pneg %p191
        %p279 = pneg %p188
        %p280 = scmp.lt.s32.totalorder %s24, 1
        %s281 = scalar_select %p280, %s24, 1
        %p282 = scmp.lt.s32.totalorder %s25, 0
        %s283 = scalar_select %p282, %s25, 0
        %s284 = sadd.s32 %s283, %s281
        %s285 = smul.addr %s284, 8
        %s286 = scalar_lea.vmem %s5, %s285
        %p287 = scmp.lt.s32.totalorder %s24, 1
        %s288 = scalar_select %p287, %s24, 1
        %p289 = scmp.lt.s32.totalorder %s25, 0
        %s290 = scalar_select %p289, %s25, 0
        %s291 = sadd.s32 %s290, %s288
        %s292 = smul.addr %s291, 8
        %s293 = scalar_lea.vmem %s0, %s292
        %p294 = scmp.lt.s32.totalorder %s25, 0
        %s295 = scalar_select %p294, %s25, 0
        %s296 = smul.addr %s295, 8
        %s297 = scalar_lea.vmem %s1, %s296
        %p298 = scmp.lt.s32.totalorder %s25, 0
        %s299 = scalar_select %p298, %s25, 0
        %s300 = smul.addr %s299, 8
        %s301 = scalar_lea.vmem %s2, %s300
        %p302 = scmp.lt.s32.totalorder %s24, 1
        %s303 = scalar_select %p302, %s24, 1
        %p304 = scmp.lt.s32.totalorder %s25, 0
        %s305 = scalar_select %p304, %s25, 0
        %s306 = sadd.s32 %s305, %s303
        %s307 = smul.addr %s306, 8
        %s308 = scalar_lea.vmem %s4, %s307
        %p309 = scmp.lt.s32.totalorder %s24, 1
        %s310 = scalar_select %p309, %s24, 1
        %p311 = scmp.lt.s32.totalorder %s25, 0
        %s312 = scalar_select %p311, %s25, 0
        %s313 = sadd.s32 %s312, %s310
        %s314 = smul.addr %s313, 8
        %s315 = scalar_lea.vmem %s5, %s314
        %v316 = vld [vmem:[%s293] sm:$0xff]
        %317 = vadd.xlane.f32.xlu0 %v316
        %v318 = vpop.xlane.xlu0 %317
        %v319 = vmul.f32 %v318, 0.0625
        %v320 = vsub.f32 %v316, %v319
        %v321 = vlaneseq
        %v322 = vand.u32 %v321, 127
        %vm323 = vcmp.lt.s32.totalorder %v322, 16
        %v324 = vsel %vm323, 1, 0
        %vm325 = vcmp.eq.s32.totalorder %v324, 1
        %v326 = vsel %vm325, %v320, 0.0
        %v327 = vmul.f32 %v326, %v326
        %328 = vadd.xlane.f32.xlu0 %v327
        %v329 = vpop.xlane.xlu0 %328
        %v330 = vmul.f32 %v329, 0.0625
        %v331 = vmax.f32 %v330, 1e-05
        %v332 = vrsqrt.pop %v331
        %v333 = vld [vmem:[%s297] sm:$0xff]
        %v334 = vld [vmem:[%s301] sm:$0xff]
        %v335 = vmul.f32 %v332, %v333
        %337 = vset.pattern.permute.xlu0 0
        %338 = vperm.xlu0 %337, %v335
        %v339 = vpop.permute.xlu0 %338
        %v341 = vmul.f32 %v320, %v339
        %343 = vset.pattern.permute.xlu0 0
        %344 = vperm.xlu0 %343, %v334
        %v345 = vpop.permute.xlu0 %344
        %v347 = vadd.f32 %v341, %v345
        %348 = vst [vmem:[%s268] sm:$0xff] %v347
        %vm349 = vcmask 7168
        %350 = vst.msk [vmem:[%s308] sm:$0xff] %vm349, %v319
        %351 = vst.msk [vmem:[%s315] sm:$0xff] %vm349, %v330
        %s352 = sand.u32 %s122, 1
        %s353 = scalar_lea.sflag [#allocation3], %s352
        %s354 = sand.u32 %s122, 1
        %s355 = smul.addr %s354, 8
        %s356 = scalar_lea.vmem [#allocation2], %s355
        %p357 = scmp.lt.s32.totalorder %s24, 1
        %s358 = scalar_select %p357, %s24, 1
        %p359 = scmp.lt.s32.totalorder %s25, 0
        %s360 = scalar_select %p359, %s25, 0
        %s361 = sadd.s32 %s360, %s358
        %s362 = smul.addr %s361, 8
        %s363 = scalar_lea.vmem %s4, %s362
        %p364 = scmp.lt.s32.totalorder %s24, 1
        %s365 = scalar_select %p364, %s24, 1
        %p366 = scmp.lt.s32.totalorder %s25, 0
        %s367 = scalar_select %p366, %s25, 0
        %s368 = sadd.s32 %s367, %s365
        %s369 = smul.addr %s368, 8
        %s370 = scalar_lea.vmem %s5, %s369
        // Predicated region
        $region33: #{tpu_custom_call.1} parent=31 // pred_check
          %p371 = pneg %p132
        $region34: #{tpu_custom_call.1} parent=31 // pred_check_branch
          %373 = sbr.rel (%p371) target = $region36
        $region35: #{tpu_custom_call.1} parent=31 // pred_region
          %s375 = ssub.s32 128, 128
          %376 = vsyncadd %s353, %s375
          %s377 = sadd.s32 %s25, %s24
          %s378 = smul.addr %s377, 128
          %s379 = scalar_lea.hbm %s3, %s378
          %s381 = sshll.u32 %s356, 4
          %s382 = int_to_ptr.vmem [resolvable:$true] %s381
          %384 = dma.vmem_to_hbm [thread:$0]  %s382, 128, %s379, %s353
        $region36: #{tpu_custom_call.1} parent=31 // pred_fallthru
          _
        // Predicated region
        $region37: #{tpu_custom_call.1} parent=31 // pred_check
          %p385 = pneg %p160
        $region38: #{tpu_custom_call.1} parent=31 // pred_check_branch
          %387 = sbr.rel (%p385) target = $region40
        $region39: #{tpu_custom_call.1} parent=31 // pred_region
          _
        $region40: #{tpu_custom_call.1} parent=31 // pred_fallthru
          _
        // Predicated region
        $region41: #{tpu_custom_call.1} parent=31 // pred_check
          %p388 = pneg %p188
        $region42: #{tpu_custom_call.1} parent=31 // pred_check_branch
          %390 = sbr.rel (%p388) target = $region44
        $region43: #{tpu_custom_call.1} parent=31 // pred_region
          _
        $region44: #{tpu_custom_call.1} parent=31 // pred_fallthru
          _
      $region32: #{tpu_custom_call.1} parent=5 // pred_fallthru
        _
      %p391 = scmp.le.s32.totalorder 2, %s15
      // Predicated region
      $region45: #{tpu_custom_call.1} parent=5 // pred_check
        %p392 = pneg %p391
      $region46: #{tpu_custom_call.1} parent=5 // pred_check_branch
        %394 = sbr.rel (%p392) target = $region48
      $region47: #{tpu_custom_call.1} parent=5 // pred_region
        %s395 = ssub.s32 %s15, 2
        // Predicated region
        $region49: #{tpu_custom_call.1} parent=47 // pred_check
          %p396 = pneg %p138
        $region50: #{tpu_custom_call.1} parent=47 // pred_check_branch
          %398 = sbr.rel (%p396) target = $region52
        $region51: #{tpu_custom_call.1} parent=47 // pred_region
          %s399 = sand.u32 %s123, 1
          %s400 = scalar_lea.sflag [#allocation3], %s399
          %s401 = sand.u32 %s123, 1
          %s402 = smul.addr %s401, 8
          %s403 = scalar_lea.vmem [#allocation2], %s402
          %404 = dma.done %s400, 128
        $region52: #{tpu_custom_call.1} parent=47 // pred_fallthru
          _
        // Predicated region
        $region53: #{tpu_custom_call.1} parent=47 // pred_check
          %p405 = pneg %p166
        $region54: #{tpu_custom_call.1} parent=47 // pred_check_branch
          %407 = sbr.rel (%p405) target = $region56
        $region55: #{tpu_custom_call.1} parent=47 // pred_region
          %p408 = scmp.lt.s32.totalorder %s26, 1
          %s409 = scalar_select %p408, %s26, 1
          %p410 = scmp.lt.s32.totalorder %s27, 0
          %s411 = scalar_select %p410, %s27, 0
          %s412 = sadd.s32 %s411, %s409
          %s413 = smul.addr %s412, 8
          %s414 = scalar_lea.vmem %s4, %s413
        $region56: #{tpu_custom_call.1} parent=47 // pred_fallthru
          _
        // Predicated region
        $region57: #{tpu_custom_call.1} parent=47 // pred_check
          %p415 = pneg %p194
        $region58: #{tpu_custom_call.1} parent=47 // pred_check_branch
          %417 = sbr.rel (%p415) target = $region60
        $region59: #{tpu_custom_call.1} parent=47 // pred_region
          %p418 = scmp.lt.s32.totalorder %s26, 1
          %s419 = scalar_select %p418, %s26, 1
          %p420 = scmp.lt.s32.totalorder %s27, 0
          %s421 = scalar_select %p420, %s27, 0
          %s422 = sadd.s32 %s421, %s419
          %s423 = smul.addr %s422, 8
          %s424 = scalar_lea.vmem %s5, %s423
        $region60: #{tpu_custom_call.1} parent=47 // pred_fallthru
          _
      $region48: #{tpu_custom_call.1} parent=5 // pred_fallthru
        _
    $region6: #{tpu_custom_call.1} parent=1 // loop_footer
      %s19 = sadd.s32 1, %s15
    $region7: #{tpu_custom_call.1} parent=1 // loop_footer_branch
      %14 = sbr.rel target = $region3
    $region8: #{tpu_custom_call.1} parent=1 // loop_exit
      _
    %425 = vsyncpa [#allocation3], 1
    %s426 = scalar_lea.sflag [#allocation3], 1
    %427 = vsyncpa %s426, 1

</llo_original>
